<compile_context>
chip_gen: v6e
topology: v6e:2x2x1
jax: 0.10.0
libtpu: 0.0.40
codegen_flags: <defaults>
</compile_context>

<pallas_src>
import functools

import jax
import jax.numpy as jnp
from jax.experimental import pallas as pl
from jax.experimental.pallas import tpu as pltpu

_HID = 128                    # hidden width of the MLP
_P_ROWS = 3 * _HID + 8        # packed-parameter slab rows (W1 | W2 | W3 | bias block)


def _round_up(x, m):
    return (x + m - 1) // m * m


def mlp_kernel(x_ref, p_ref, o_ref, *, state_dim, n_actions):
    """Fused 3-layer MLP on one batch tile: (TB, state_dim) -> (TB, n_actions)."""
    x = x_ref[...]                                   # (TB, state_dim), lane-narrow

    w1 = p_ref[0:_round_up(state_dim, 8), :]         # aligned block covering W1 rows
    w2 = p_ref[_HID:2 * _HID, :]                     # (128, 128)
    w3 = p_ref[2 * _HID:3 * _HID, :]                 # (128, 128), cols >= n_actions are zero
    bias = p_ref[3 * _HID:3 * _HID + 8, :]           # one aligned (8,128) load
    b1 = bias[0:1, :]
    b2 = bias[1:2, :]
    b3 = bias[2:3, :]

    # Layer 1: contraction length is tiny (state_dim), so do it as broadcast
    # multiply-adds on the VPU; initializing with b1 folds the bias in for free.
    h = b1                                           # (1, 128) -> broadcasts up
    for j in range(state_dim):
        h = h + x[:, j:j + 1] * w1[j:j + 1, :]       # (TB,1)*(1,128) -> (TB,128)
    h = jnp.maximum(h, 0.0)

    # Layers 2 & 3: uniform (TB,128)x(128,128) MXU tiles with f32 accumulation.
    h = jnp.maximum(jnp.dot(h, w2, preferred_element_type=jnp.float32) + b2, 0.0)
    y = jnp.dot(h, w3, preferred_element_type=jnp.float32) + b3

    # Lane-narrow store: only the real n_actions lanes are written to HBM.
    o_ref[...] = y[:, 0:n_actions].astype(o_ref.dtype)


def pack_params(params, state_dim, n_actions):
    """Pack (transposed) weights + biases into one (392,128) f32 VMEM slab.

    Rows [0:128)   = W1 (in,out), rows >= state_dim zero
    Rows [128:256) = W2
    Rows [256:384) = W3, cols >= n_actions zero
    Rows [384:392) = biases: row 0 = b1, row 1 = b2, row 2 = b3 (zero-padded lanes)
    """
    assert state_dim <= _HID and n_actions <= _HID
    w1 = jnp.zeros((_HID, _HID), jnp.float32).at[:state_dim, :].set(
        params["w1"].astype(jnp.float32))
    w2 = params["w2"].astype(jnp.float32)
    w3 = jnp.zeros((_HID, _HID), jnp.float32).at[:, :n_actions].set(
        params["w3"].astype(jnp.float32))
    b1 = params["b1"].reshape(1, _HID).astype(jnp.float32)
    b2 = params["b2"].reshape(1, _HID).astype(jnp.float32)
    b3 = jnp.zeros((1, _HID), jnp.float32).at[:, :n_actions].set(
        params["b3"].reshape(1, -1).astype(jnp.float32))
    bias_blk = jnp.concatenate([b1, b2, b3, jnp.zeros((5, _HID), jnp.float32)], axis=0)
    return jnp.concatenate([w1, w2, w3, bias_blk], axis=0)          # (392, 128)


def dqn_forward(state, packed_params, state_dim, n_actions, tb=None):
    """state: (B, state_dim) float. packed_params: output of pack_params."""
    b = state.shape[0]
    if tb is None:
        b8 = _round_up(max(b, 8), 8)
        if b8 <= 128:
            tb = b8                                   # tiny acting batch: one step, min latency
        else:
            # >= 2 grid steps so v7x's two TensorCores both get work; cap tile at
            # 2048 rows (well inside every chip's scoped-VMEM budget at these sizes).
            tb = min(2048, _round_up(pl.cdiv(b8, 2), 8))
    tb = _round_up(tb, 8)
    b_pad = _round_up(b, tb)

    x = state.astype(jnp.float32)
    if b_pad != b:
        # Row-only padding of the narrow (state_dim-wide) input; padded rows are
        # discarded by the row slice on the output.
        x = jnp.pad(x, ((0, b_pad - b), (0, 0)))

    kernel = functools.partial(mlp_kernel, state_dim=state_dim, n_actions=n_actions)
    out = pl.pallas_call(
        kernel,
        out_shape=jax.ShapeDtypeStruct((b_pad, n_actions), jnp.float32),
        grid=(b_pad // tb,),
        in_specs=[
            # Lane-narrow batch tile: last dim == full array dim (state_dim), legal.
            pl.BlockSpec((tb, state_dim), lambda i: (i, 0)),
            # Packed params: constant index_map -> stays VMEM-resident across steps.
            pl.BlockSpec((_P_ROWS, _HID), lambda i: (0, 0)),
        ],
        out_specs=pl.BlockSpec((tb, n_actions), lambda i: (i, 0)),
        compiler_params=pltpu.CompilerParams(
            dimension_semantics=("parallel",)),
    )(x, packed_params)
    return out if b_pad == b else out[:b]


def init_params(key, state_dim, n_actions):
    """PyTorch-style uniform init U(-1/sqrt(fan_in), 1/sqrt(fan_in)).

    Weights are stored already transposed to (in, out) for the kernel."""
    def linear(k, fan_in, fan_out):
        kw, kb = jax.random.split(k)
        bound = 1.0 / jnp.sqrt(jnp.float32(fan_in))
        w = jax.random.uniform(kw, (fan_in, fan_out), jnp.float32, -bound, bound)
        b = jax.random.uniform(kb, (1, fan_out), jnp.float32, -bound, bound)
        return w, b

    k1, k2, k3 = jax.random.split(key, 3)
    w1, b1 = linear(k1, state_dim, _HID)
    w2, b2 = linear(k2, _HID, _HID)
    w3, b3 = linear(k3, _HID, n_actions)
    return {"w1": w1, "b1": b1, "w2": w2, "b2": b2, "w3": w3, "b3": b3}


def reference_forward(state, params):
    """Plain-JAX reference (same math as the PyTorch module)."""
    h = jnp.maximum(state @ params["w1"] + params["b1"], 0.0)
    h = jnp.maximum(h @ params["w2"] + params["b2"], 0.0)
    return h @ params["w3"] + params["b3"]


if __name__ == "__main__":
    state_dim = 4     # CartPole observation dim
    n_actions = 2     # CartPole action dim
    batch = 8

    key = jax.random.PRNGKey(0)
    k_params, k_state, k_state2 = jax.random.split(key, 3)

    params = init_params(k_params, state_dim, n_actions)
    packed = pack_params(params, state_dim, n_actions)

    # Small-batch acting path (single grid step, no wrapper pad/slice ops).
    state = jax.random.normal(k_state, (batch, state_dim), jnp.float32)
    out = jax.block_until_ready(dqn_forward(state, packed, state_dim, n_actions))
    ref = reference_forward(state, params)
    assert out.shape == (batch, n_actions), out.shape
    assert jnp.allclose(out, ref, atol=1e-5, rtol=1e-5), "mismatch vs reference (B=8)"

    # Larger, non-tile-multiple batch: exercises row padding + 2-step parallel grid.
    state2 = jax.random.normal(k_state2, (200, state_dim), jnp.float32)
    out2 = jax.block_until_ready(dqn_forward(state2, packed, state_dim, n_actions))
    ref2 = reference_forward(state2, params)
    assert out2.shape == (200, n_actions), out2.shape
    assert jnp.allclose(out2, ref2, atol=1e-5, rtol=1e-5), "mismatch vs reference (B=200)"

    print("KERNEL_OK")
</pallas_src>

<mosaic_0001>
module attributes {stable_mosaic.version = 11 : i64} {
  func.func @mlp_kernel(%arg0: i32, %arg1: memref<8x4xf32, #tpu.memory_space<vmem>>, %arg2: memref<392x128xf32, #tpu.memory_space<vmem>>, %arg3: memref<8x2xf32, #tpu.memory_space<vmem>>) attributes {dimension_semantics = [#tpu.dimension_semantics<parallel>], iteration_bounds = array<i64: 1>, scalar_prefetch = 0 : i64, scratch_operands = 0 : i64, tpu.core_type = #tpu.core_type<tc>, window_params = [{transform_indices = @transform_0, window_bounds = array<i64: 8, 4>}, {pipeline_mode = #tpu.pipeline_mode<synchronous>, transform_indices = @transform_1, window_bounds = array<i64: 392, 128>}, {transform_indices = @transform_2, window_bounds = array<i64: 8, 2>}]} {
    %c0 = arith.constant 0 : index
    %c0_0 = arith.constant 0 : index
    %0 = vector.load %arg1[%c0, %c0_0] : memref<8x4xf32, #tpu.memory_space<vmem>>, vector<8x4xf32>
    %c0_1 = arith.constant 0 : index
    %c0_2 = arith.constant 0 : index
    %1 = vector.load %arg2[%c0_1, %c0_2] : memref<392x128xf32, #tpu.memory_space<vmem>>, vector<8x128xf32>
    %c128 = arith.constant 128 : index
    %c0_3 = arith.constant 0 : index
    %2 = vector.load %arg2[%c128, %c0_3] : memref<392x128xf32, #tpu.memory_space<vmem>>, vector<128x128xf32>
    %c256 = arith.constant 256 : index
    %c0_4 = arith.constant 0 : index
    %3 = vector.load %arg2[%c256, %c0_4] : memref<392x128xf32, #tpu.memory_space<vmem>>, vector<128x128xf32>
    %c384 = arith.constant 384 : index
    %c0_5 = arith.constant 0 : index
    %4 = vector.load %arg2[%c384, %c0_5] : memref<392x128xf32, #tpu.memory_space<vmem>>, vector<8x128xf32>
    %5 = vector.extract_strided_slice %4 {offsets = [0, 0], sizes = [1, 128], strides = [1, 1]} : vector<8x128xf32> to vector<1x128xf32>
    %6 = vector.extract_strided_slice %4 {offsets = [1, 0], sizes = [1, 128], strides = [1, 1]} : vector<8x128xf32> to vector<1x128xf32>
    %7 = vector.extract_strided_slice %4 {offsets = [2, 0], sizes = [1, 128], strides = [1, 1]} : vector<8x128xf32> to vector<1x128xf32>
    %8 = vector.extract_strided_slice %0 {offsets = [0, 0], sizes = [8, 1], strides = [1, 1]} : vector<8x4xf32> to vector<8x1xf32>
    %9 = vector.extract_strided_slice %1 {offsets = [0, 0], sizes = [1, 128], strides = [1, 1]} : vector<8x128xf32> to vector<1x128xf32>
    %10 = vector.broadcast %8 : vector<8x1xf32> to vector<8x128xf32>
    %11 = vector.broadcast %9 : vector<1x128xf32> to vector<8x128xf32>
    %12 = arith.mulf %10, %11 : vector<8x128xf32>
    %13 = vector.broadcast %5 : vector<1x128xf32> to vector<8x128xf32>
    %14 = arith.addf %13, %12 : vector<8x128xf32>
    %15 = vector.extract_strided_slice %0 {offsets = [0, 1], sizes = [8, 1], strides = [1, 1]} : vector<8x4xf32> to vector<8x1xf32>
    %16 = vector.extract_strided_slice %1 {offsets = [1, 0], sizes = [1, 128], strides = [1, 1]} : vector<8x128xf32> to vector<1x128xf32>
    %17 = vector.broadcast %15 : vector<8x1xf32> to vector<8x128xf32>
    %18 = vector.broadcast %16 : vector<1x128xf32> to vector<8x128xf32>
    %19 = arith.mulf %17, %18 : vector<8x128xf32>
    %20 = arith.addf %14, %19 : vector<8x128xf32>
    %21 = vector.extract_strided_slice %0 {offsets = [0, 2], sizes = [8, 1], strides = [1, 1]} : vector<8x4xf32> to vector<8x1xf32>
    %22 = vector.extract_strided_slice %1 {offsets = [2, 0], sizes = [1, 128], strides = [1, 1]} : vector<8x128xf32> to vector<1x128xf32>
    %23 = vector.broadcast %21 : vector<8x1xf32> to vector<8x128xf32>
    %24 = vector.broadcast %22 : vector<1x128xf32> to vector<8x128xf32>
    %25 = arith.mulf %23, %24 : vector<8x128xf32>
    %26 = arith.addf %20, %25 : vector<8x128xf32>
    %27 = vector.extract_strided_slice %0 {offsets = [0, 3], sizes = [8, 1], strides = [1, 1]} : vector<8x4xf32> to vector<8x1xf32>
    %28 = vector.extract_strided_slice %1 {offsets = [3, 0], sizes = [1, 128], strides = [1, 1]} : vector<8x128xf32> to vector<1x128xf32>
    %29 = vector.broadcast %27 : vector<8x1xf32> to vector<8x128xf32>
    %30 = vector.broadcast %28 : vector<1x128xf32> to vector<8x128xf32>
    %31 = arith.mulf %29, %30 : vector<8x128xf32>
    %32 = arith.addf %26, %31 : vector<8x128xf32>
    %cst = arith.constant 0.000000e+00 : f32
    %33 = vector.broadcast %cst : f32 to vector<8x128xf32>
    %34 = arith.maximumf %32, %33 : vector<8x128xf32>
    %cst_6 = arith.constant dense<0.000000e+00> : vector<8x128xf32>
    %35 = tpu.matmul %34, %2, %cst_6 {dimension_numbers = #tpu.dot_dimension_numbers<[1], [0], [0], [1], [0, 0, 1, 1], [], []>} : vector<8x128xf32>, vector<128x128xf32>, vector<8x128xf32> -> vector<8x128xf32>
    %36 = vector.broadcast %6 : vector<1x128xf32> to vector<8x128xf32>
    %37 = arith.addf %35, %36 : vector<8x128xf32>
    %cst_7 = arith.constant 0.000000e+00 : f32
    %38 = vector.broadcast %cst_7 : f32 to vector<8x128xf32>
    %39 = arith.maximumf %37, %38 : vector<8x128xf32>
    %cst_8 = arith.constant dense<0.000000e+00> : vector<8x128xf32>
    %40 = tpu.matmul %39, %3, %cst_8 {dimension_numbers = #tpu.dot_dimension_numbers<[1], [0], [0], [1], [0, 0, 1, 1], [], []>} : vector<8x128xf32>, vector<128x128xf32>, vector<8x128xf32> -> vector<8x128xf32>
    %41 = vector.broadcast %7 : vector<1x128xf32> to vector<8x128xf32>
    %42 = arith.addf %40, %41 : vector<8x128xf32>
    %43 = vector.extract_strided_slice %42 {offsets = [0, 0], sizes = [8, 2], strides = [1, 1]} : vector<8x128xf32> to vector<8x2xf32>
    %c0_9 = arith.constant 0 : index
    %c0_10 = arith.constant 0 : index
    %44 = vector.load %arg3[%c0_9, %c0_10] : memref<8x2xf32, #tpu.memory_space<vmem>>, vector<8x2xf32>
    tpu.vector_store %arg3[%c0_9, %c0_10], %43 {strides = array<i32>} : memref<8x2xf32, #tpu.memory_space<vmem>>, vector<8x2xf32>,
    return
  }
  func.func @transform_0(%arg0: i32) -> (i32, i32) {
    %c0_i32 = arith.constant 0 : i32
    %c0_i32_0 = arith.constant 0 : i32
    return %arg0, %c0_i32 : i32, i32
  }
  func.func @transform_1(%arg0: i32) -> (i32, i32) {
    %c0_i32 = arith.constant 0 : i32
    %c0_i32_0 = arith.constant 0 : i32
    %c0_i32_1 = arith.constant 0 : i32
    return %c0_i32, %c0_i32_0 : i32, i32
  }
  func.func @transform_2(%arg0: i32) -> (i32, i32) {
    %c0_i32 = arith.constant 0 : i32
    %c0_i32_0 = arith.constant 0 : i32
    return %arg0, %c0_i32 : i32, i32
  }
}

</mosaic_0001>

<llo_original>
// kernel: tpu_custom_call.1
$region0: #{tpu_custom_call.1}
  #allocation0 [shape = 'u32[]', space=smem, size = 0x4, offset = 0x4, fixed_abs, tag = 'smem constant byte address 0x4 - core index']
  #allocation1 [shape = 'u32[144,128]{1,0:T(1,128)}', space=vmem, size = 0x12000, scoped, tag = 'internal scratch']
  %s0 = inlined_call_operand.vmem [shape: f32[8,4], index: 0, kind: input, shape index: {}]
  %s1 = inlined_call_operand.hbm [shape: f32[392,128], index: 1, kind: input, shape index: {}]
  %s2 = inlined_call_operand.vmem [shape: f32[8,2], index: 2, kind: output, shape index: {}]
  %s3 = sld [smem:[#allocation0]]
  $region22: #{tpu_custom_call.1} parent=0
    _
  %s5 = ssub.s32 1, %s3
  %s6 = scalar_select 0, %s5, %s3
  $region1: #{tpu_custom_call.1} parent=0
    #allocation2 [shape = 'u8[200704]{0}', space=vmem, size = 0x31000, scoped, tag = 'input window, operand 1, single buffered']
    #allocation3 [shape = 's32[1]{0}', space=sflag, size = 0x4, scoped, tag = 'scoped memory for tpu_custom_call.1']
    %7 = vsyncpa [#allocation3], 0
    // Predicated region
    $region2: #{tpu_custom_call.1} parent=1 // pred_check
      _
    $region3: #{tpu_custom_call.1} parent=1 // pred_check_branch
      %9 = sbr.rel (0) target = $region5
    $region4: #{tpu_custom_call.1} parent=1 // pred_region
      _
    $region5: #{tpu_custom_call.1} parent=1 // pred_fallthru
      _
    // Predicated region
    $region6: #{tpu_custom_call.1} parent=1 // pred_check
      _
    $region7: #{tpu_custom_call.1} parent=1 // pred_check_branch
      %11 = sbr.rel (0) target = $region9
    $region8: #{tpu_custom_call.1} parent=1 // pred_region
      %s13 = ssub.s32 6272, 6272
      %14 = vsyncadd [#allocation3], %s13
      %s15 = sshll.u32 [#allocation2], 4
      %s16 = int_to_ptr.vmem [resolvable:$true] %s15
      %21 = dma.hbm_to_vmem [thread:$0]  %s1, 6272, %s16, [#allocation3], 128, 128, 8
    $region9: #{tpu_custom_call.1} parent=1 // pred_fallthru
      _
    // Predicated region
    $region10: #{tpu_custom_call.1} parent=1 // pred_check
      _
    $region11: #{tpu_custom_call.1} parent=1 // pred_check_branch
      %23 = sbr.rel (0) target = $region13
    $region12: #{tpu_custom_call.1} parent=1 // pred_region
      %24 = dma.done [#allocation3], 6272
    $region13: #{tpu_custom_call.1} parent=1 // pred_fallthru
      _
    %v25 = vld [vmem:[%s0] sm:$0xff]
    %v26 = vld [vmem:[#allocation2] sm:$0xff]
    %v27 = vld [vmem:[#allocation2 + $0x80] sm:$0xff]
    %v28 = vld [vmem:[#allocation2 + $0x88] sm:$0xff]
    %v29 = vld [vmem:[#allocation2 + $0x90] sm:$0xff]
    %v30 = vld [vmem:[#allocation2 + $0x98] sm:$0xff]
    %v31 = vld [vmem:[#allocation2 + $0xa0] sm:$0xff]
    %v32 = vld [vmem:[#allocation2 + $0xa8] sm:$0xff]
    %v33 = vld [vmem:[#allocation2 + $0xb0] sm:$0xff]
    %v34 = vld [vmem:[#allocation2 + $0xb8] sm:$0xff]
    %v35 = vld [vmem:[#allocation2 + $0xc0] sm:$0xff]
    %v36 = vld [vmem:[#allocation2 + $0xc8] sm:$0xff]
    %v37 = vld [vmem:[#allocation2 + $0xd0] sm:$0xff]
    %v38 = vld [vmem:[#allocation2 + $0xd8] sm:$0xff]
    %v39 = vld [vmem:[#allocation2 + $0xe0] sm:$0xff]
    %v40 = vld [vmem:[#allocation2 + $0xe8] sm:$0xff]
    %v41 = vld [vmem:[#allocation2 + $0xf0] sm:$0xff]
    %v42 = vld [vmem:[#allocation2 + $0xf8] sm:$0xff]
    %v43 = vld [vmem:[#allocation2 + $0x100] sm:$0xff]
    %v44 = vld [vmem:[#allocation2 + $0x108] sm:$0xff]
    %v45 = vld [vmem:[#allocation2 + $0x110] sm:$0xff]
    %v46 = vld [vmem:[#allocation2 + $0x118] sm:$0xff]
    %v47 = vld [vmem:[#allocation2 + $0x120] sm:$0xff]
    %v48 = vld [vmem:[#allocation2 + $0x128] sm:$0xff]
    %v49 = vld [vmem:[#allocation2 + $0x130] sm:$0xff]
    %v50 = vld [vmem:[#allocation2 + $0x138] sm:$0xff]
    %v51 = vld [vmem:[#allocation2 + $0x140] sm:$0xff]
    %v52 = vld [vmem:[#allocation2 + $0x148] sm:$0xff]
    %v53 = vld [vmem:[#allocation2 + $0x150] sm:$0xff]
    %v54 = vld [vmem:[#allocation2 + $0x158] sm:$0xff]
    %v55 = vld [vmem:[#allocation2 + $0x160] sm:$0xff]
    %v56 = vld [vmem:[#allocation2 + $0x168] sm:$0xff]
    %v57 = vld [vmem:[#allocation2 + $0x170] sm:$0xff]
    %v58 = vld [vmem:[#allocation2 + $0x178] sm:$0xff]
    %v59 = vld [vmem:[#allocation2 + $0x180] sm:$0xff]
    %61 = vset.pattern.permute.xlu0 0
    %62 = vperm.xlu0 %61, %v25
    %v63 = vpop.permute.xlu0 %62
    %v65 = vlaneseq
    %v66 = vshrl.u32 %v65, 7
    %v67 = vsub.s32 0, %v66
    %v68 = vrot.slane %v26, %v67
    %v69 = vmul.f32 %v63, %v68
    %v70 = vlaneseq
    %v71 = vshrl.u32 %v70, 7
    %v72 = vsub.s32 0, %v71
    %v73 = vrot.slane %v59, %v72
    %v74 = vadd.f32 %v73, %v69
    %75 = vset.pattern.permute.xlu0 1
    %76 = vperm.xlu0 %75, %v25
    %v77 = vpop.permute.xlu0 %76
    %v79 = vlaneseq
    %v80 = vshrl.u32 %v79, 7
    %v81 = vsub.s32 1, %v80
    %v82 = vrot.slane %v26, %v81
    %v83 = vmul.f32 %v77, %v82
    %v84 = vadd.f32 %v74, %v83
    %85 = vset.pattern.permute.xlu0 2
    %86 = vperm.xlu0 %85, %v25
    %v87 = vpop.permute.xlu0 %86
    %v89 = vlaneseq
    %v90 = vshrl.u32 %v89, 7
    %v91 = vsub.s32 2, %v90
    %v92 = vrot.slane %v26, %v91
    %v93 = vmul.f32 %v87, %v92
    %v94 = vadd.f32 %v84, %v93
    %95 = vset.pattern.permute.xlu0 3
    %96 = vperm.xlu0 %95, %v25
    %v97 = vpop.permute.xlu0 %96
    %v99 = vlaneseq
    %v100 = vshrl.u32 %v99, 7
    %v101 = vsub.s32 3, %v100
    %v102 = vrot.slane %v26, %v101
    %v103 = vmul.f32 %v97, %v102
    %v104 = vadd.f32 %v94, %v103
    %v105 = vmax.f32 %v104, 0.0
    %v106 = vlaneseq
    %v107 = vshrl.u32 %v106, 7
    %v108 = vsub.s32 1, %v107
    %v109 = vrot.slane %v59, %v108
    %110 = vmatprep.subr.mxu0 0.0
    %111 = vmatpush1.msra.mxu0 %v42
    %112 = vmatprep.subr.mxu0 0.0
    %113 = vmatpush1.msra.mxu0 %v41
    %114 = vmatprep.subr.mxu0 0.0
    %115 = vmatpush1.msra.mxu0 %v40
    %116 = vmatprep.subr.mxu0 0.0
    %117 = vmatpush1.msra.mxu0 %v39
    %118 = vmatprep.subr.mxu0 0.0
    %119 = vmatpush1.msra.mxu0 %v38
    %120 = vmatprep.subr.mxu0 0.0
    %121 = vmatpush1.msra.mxu0 %v37
    %122 = vmatprep.subr.mxu0 0.0
    %123 = vmatpush1.msra.mxu0 %v36
    %124 = vmatprep.subr.mxu0 0.0
    %125 = vmatpush1.msra.mxu0 %v35
    %126 = vmatprep.subr.mxu0 0.0
    %127 = vmatpush1.msra.mxu0 %v34
    %128 = vmatprep.subr.mxu0 0.0
    %129 = vmatpush1.msra.mxu0 %v33
    %130 = vmatprep.subr.mxu0 0.0
    %131 = vmatpush1.msra.mxu0 %v32
    %132 = vmatprep.subr.mxu0 0.0
    %133 = vmatpush1.msra.mxu0 %v31
    %134 = vmatprep.subr.mxu0 0.0
    %135 = vmatpush1.msra.mxu0 %v30
    %136 = vmatprep.subr.mxu0 0.0
    %137 = vmatpush1.msra.mxu0 %v29
    %138 = vmatprep.subr.mxu0 0.0
    %139 = vmatpush1.msra.mxu0 %v28
    %140 = vmatprep.subr.mxu0 0.0
    %141 = vmatpush1.msra.mxu0 %v27
    %142 = vmatprep.subr.mxu0 0.0
    %143 = vmatpush2.msra.mxu0 0.0
    %144 = vmatprep.subr.mxu0 0.0
    %145 = vmatpush2.msra.mxu0 0.0
    %146 = vmatprep.subr.mxu0 0.0
    %147 = vmatpush2.msra.mxu0 0.0
    %148 = vmatprep.subr.mxu0 0.0
    %149 = vmatpush2.msra.mxu0 0.0
    %150 = vmatprep.subr.mxu0 0.0
    %151 = vmatpush2.msra.mxu0 0.0
    %152 = vmatprep.subr.mxu0 0.0
    %153 = vmatpush2.msra.mxu0 0.0
    %154 = vmatprep.subr.mxu0 0.0
    %155 = vmatpush2.msra.mxu0 0.0
    %156 = vmatprep.subr.mxu0 0.0
    %157 = vmatpush2.msra.mxu0 0.0
    %158 = vmatprep.subr.mxu0 0.0
    %159 = vmatpush2.msra.mxu0 0.0
    %160 = vmatprep.subr.mxu0 0.0
    %161 = vmatpush2.msra.mxu0 0.0
    %162 = vmatprep.subr.mxu0 0.0
    %163 = vmatpush2.msra.mxu0 0.0
    %164 = vmatprep.subr.mxu0 0.0
    %165 = vmatpush2.msra.mxu0 0.0
    %166 = vmatprep.subr.mxu0 0.0
    %167 = vmatpush2.msra.mxu0 0.0
    %168 = vmatprep.subr.mxu0 0.0
    %169 = vmatpush2.msra.mxu0 0.0
    %170 = vmatprep.subr.mxu0 0.0
    %171 = vmatpush2.msra.mxu0 0.0
    %172 = vmatprep.subr.mxu0 0.0
    %173 = vmatpush2.msra.mxu0 0.0
    %174 = vmatprep.mubr.f32.mxu0 0.0
    %175 = vmatmul.mubr.f32.gmra.mxu0 %v105
    %v176 = vpop.f32.mrf.mxu0
    %v177 = vadd.f32 %v109, %v176
    %v178 = vpop.f32.mrf.mxu0
    %179 = vdwg.mxu0
    %v180 = vmax.f32 %v177, 0.0
    %v181 = vlaneseq
    %v182 = vshrl.u32 %v181, 7
    %v183 = vsub.s32 2, %v182
    %v184 = vrot.slane %v59, %v183
    %185 = vmatprep.subr.mxu0 0.0
    %186 = vmatpush1.msra.mxu0 %v58
    %187 = vmatprep.subr.mxu0 0.0
    %188 = vmatpush1.msra.mxu0 %v57
    %189 = vmatprep.subr.mxu0 0.0
    %190 = vmatpush1.msra.mxu0 %v56
    %191 = vmatprep.subr.mxu0 0.0
    %192 = vmatpush1.msra.mxu0 %v55
    %193 = vmatprep.subr.mxu0 0.0
    %194 = vmatpush1.msra.mxu0 %v54
    %195 = vmatprep.subr.mxu0 0.0
    %196 = vmatpush1.msra.mxu0 %v53
    %197 = vmatprep.subr.mxu0 0.0
    %198 = vmatpush1.msra.mxu0 %v52
    %199 = vmatprep.subr.mxu0 0.0
    %200 = vmatpush1.msra.mxu0 %v51
    %201 = vmatprep.subr.mxu0 0.0
    %202 = vmatpush1.msra.mxu0 %v50
    %203 = vmatprep.subr.mxu0 0.0
    %204 = vmatpush1.msra.mxu0 %v49
    %205 = vmatprep.subr.mxu0 0.0
    %206 = vmatpush1.msra.mxu0 %v48
    %207 = vmatprep.subr.mxu0 0.0
    %208 = vmatpush1.msra.mxu0 %v47
    %209 = vmatprep.subr.mxu0 0.0
    %210 = vmatpush1.msra.mxu0 %v46
    %211 = vmatprep.subr.mxu0 0.0
    %212 = vmatpush1.msra.mxu0 %v45
    %213 = vmatprep.subr.mxu0 0.0
    %214 = vmatpush1.msra.mxu0 %v44
    %215 = vmatprep.subr.mxu0 0.0
    %216 = vmatpush1.msra.mxu0 %v43
    %217 = vmatprep.subr.mxu0 0.0
    %218 = vmatpush2.msra.mxu0 0.0
    %219 = vmatprep.subr.mxu0 0.0
    %220 = vmatpush2.msra.mxu0 0.0
    %221 = vmatprep.subr.mxu0 0.0
    %222 = vmatpush2.msra.mxu0 0.0
    %223 = vmatprep.subr.mxu0 0.0
    %224 = vmatpush2.msra.mxu0 0.0
    %225 = vmatprep.subr.mxu0 0.0
    %226 = vmatpush2.msra.mxu0 0.0
    %227 = vmatprep.subr.mxu0 0.0
    %228 = vmatpush2.msra.mxu0 0.0
    %229 = vmatprep.subr.mxu0 0.0
    %230 = vmatpush2.msra.mxu0 0.0
    %231 = vmatprep.subr.mxu0 0.0
    %232 = vmatpush2.msra.mxu0 0.0
    %233 = vmatprep.subr.mxu0 0.0
    %234 = vmatpush2.msra.mxu0 0.0
    %235 = vmatprep.subr.mxu0 0.0
    %236 = vmatpush2.msra.mxu0 0.0
    %237 = vmatprep.subr.mxu0 0.0
    %238 = vmatpush2.msra.mxu0 0.0
    %239 = vmatprep.subr.mxu0 0.0
    %240 = vmatpush2.msra.mxu0 0.0
    %241 = vmatprep.subr.mxu0 0.0
    %242 = vmatpush2.msra.mxu0 0.0
    %243 = vmatprep.subr.mxu0 0.0
    %244 = vmatpush2.msra.mxu0 0.0
    %245 = vmatprep.subr.mxu0 0.0
    %246 = vmatpush2.msra.mxu0 0.0
    %247 = vmatprep.subr.mxu0 0.0
    %248 = vmatpush2.msra.mxu0 0.0
    %249 = vmatprep.mubr.f32.mxu0 0.0
    %250 = vmatmul.mubr.f32.gmra.mxu0 %v180
    %v251 = vpop.f32.mrf.mxu0
    %v252 = vadd.f32 %v184, %v251
    %v253 = vpop.f32.mrf.mxu0
    %254 = vdwg.mxu0
    %vm255 = vcmask 15360
    %256 = vst.msk [vmem:[%s2] sm:$0xff] %vm255, %v252
    // Predicated region
    $region14: #{tpu_custom_call.1} parent=1 // pred_check
      _
    $region15: #{tpu_custom_call.1} parent=1 // pred_check_branch
      %258 = sbr.rel (0) target = $region17
    $region16: #{tpu_custom_call.1} parent=1 // pred_region
      _
    $region17: #{tpu_custom_call.1} parent=1 // pred_fallthru
      _
    // Predicated region
    $region18: #{tpu_custom_call.1} parent=1 // pred_check
      _
    $region19: #{tpu_custom_call.1} parent=1 // pred_check_branch
      %260 = sbr.rel (0) target = $region21
    $region20: #{tpu_custom_call.1} parent=1 // pred_region
      _
    $region21: #{tpu_custom_call.1} parent=1 // pred_fallthru
      _
    %261 = vsyncpa [#allocation3], 1

</llo_original>
